<compile_context>
chip_gen: v5e
topology: v5e:2x2
jax: 0.10.0
libtpu: 0.0.40
codegen_flags: <defaults>
</compile_context>

<pallas_src>
import jax
import jax.numpy as jnp
from jax.experimental import pallas as pl
from jax.experimental.pallas import tpu as pltpu


# ----------------------------- kernels --------------------------------------

def _kernel_per_image(w_ref, shift_ref, x_ref, o_ref):
    # w_ref:     (Cout, Cin)   BN-scale-folded 1x1-conv weight
    # shift_ref: (Cout, 1)     folded bias/BN shift (broadcast over lanes)
    # x_ref:     (Cin, THW)    tile of one batch image, lane dim = spatial
    # o_ref:     (Cout, THW)   lane-dense output tile
    acc = jnp.dot(w_ref[...], x_ref[...], preferred_element_type=jnp.float32)
    o_ref[...] = jnp.maximum(acc + shift_ref[...], 0.0).astype(o_ref.dtype)


def _kernel_batched(w_ref, shift_ref, x_ref, o_ref):
    # Small-spatial path: several whole images per grid step.
    # w_ref: (Cout, Cin); shift_ref: (Cout, 1)
    # x_ref: (BN, Cin, HW); o_ref: (BN, Cout, HW)
    w = w_ref[...]
    shift = shift_ref[...]
    for b in range(x_ref.shape[0]):  # BN is a small static constant: unrolled
        acc = jnp.dot(w, x_ref[b], preferred_element_type=jnp.float32)
        o_ref[b] = jnp.maximum(acc + shift, 0.0).astype(o_ref.dtype)


# ------------------------- tile / VMEM budgeting ----------------------------

_TILE_VMEM_BUDGET = 24 << 20   # double-buffered in+out tile bytes (all gens)
_TARGET_STEP_BYTES = 1 << 20   # aim for >= ~1 MiB streamed per grid step
_MAX_LANES = 32768             # keep a few grid steps even for tiny channels


def _pick_hw_tile(hw, cin, cout, in_bytes, out_bytes):
    """VMEM-aware lane tile: full HW if it fits, else a big 128-multiple that
    preferably divides HW exactly (all stores unmasked)."""
    per_lane = 2 * (cin * in_bytes + cout * out_bytes)   # double-buffered
    max_lanes = _TILE_VMEM_BUDGET // max(per_lane, 1)
    max_lanes = min(max_lanes, _MAX_LANES)
    max_lanes = max(128, (max_lanes // 128) * 128)
    if hw <= max_lanes:
        return hw                                        # full dim: legal block
    for t in range(max_lanes, 127, -128):                # exact-divisor first
        if hw % t == 0:
            return t
    return max_lanes                                     # ragged tail is masked


def _pick_batch_block(n, per_image_bytes):
    """How many whole images per grid step on the small-spatial path."""
    bn = max(1, _TARGET_STEP_BYTES // max(per_image_bytes, 1))
    bn = min(bn, n)
    if n >= 2:
        bn = min(bn, n // 2)   # keep >= 2 grid steps for the 2 v7x TensorCores
    while bn > 1 and 2 * bn * per_image_bytes > _TILE_VMEM_BUDGET:
        bn -= 1
    while bn > 1 and n % bn != 0:                        # clean, unmasked blocks
        bn -= 1
    return bn


def _vmem_limit(tile_in_bytes, tile_out_bytes, weight_bytes):
    limit = 2 * (tile_in_bytes + tile_out_bytes) + weight_bytes + (4 << 20)
    limit = max(limit, 16 << 20)
    limit = min(limit, 48 << 20)   # headroom inside v7x's 64 MiB physical VMEM
    return int(limit)


# ------------------------------ wrapper --------------------------------------

def conv_de_head(x_nchw, w, b, gamma, beta, running_mean, running_var,
                 eps=1e-5, out_dtype=None):
    """x_nchw: (N, Cin, H, W). w: (Cout, Cin). Returns (N, Cout, H, W)."""
    N, Cin, H, W = x_nchw.shape
    Cout = w.shape[0]
    HW = H * W
    out_dtype = x_nchw.dtype if out_dtype is None else out_dtype

    # NCHW is already (N, Cin, HW)-contiguous; this reshape is free.
    x3d = x_nchw.reshape(N, Cin, HW)

    # Fold BN (inference) + conv bias into the weight and a per-channel shift.
    scale = gamma / jnp.sqrt(running_var + eps)                      # (Cout,)
    w_scaled = (w * scale[:, None]).astype(jnp.float32)              # (Cout, Cin)
    shift = ((b - running_mean) * scale + beta)[:, None]             # (Cout, 1)
    shift = shift.astype(jnp.float32)
    if x_nchw.dtype == jnp.bfloat16:
        # bf16 MXU path; accumulation stays f32 via preferred_element_type.
        w_scaled = w_scaled.astype(jnp.bfloat16)

    in_bytes = jnp.dtype(x_nchw.dtype).itemsize
    out_bytes = jnp.dtype(out_dtype).itemsize
    weight_bytes = (Cout * Cin * jnp.dtype(w_scaled.dtype).itemsize
                    + Cout * 128 * 4)  # weight tile + (padded) shift tile

    per_image_bytes = HW * (Cin * in_bytes + Cout * out_bytes)
    t_hw = _pick_hw_tile(HW, Cin, Cout, in_bytes, out_bytes)

    flops = 2 * N * HW * Cin * Cout
    cost = pl.CostEstimate(flops=flops, transcendentals=0,
                           bytes_accessed=N * per_image_bytes + weight_bytes)

    bn = _pick_batch_block(N, per_image_bytes) if (t_hw >= HW and N > 1) else 1

    if bn >= 2:
        # Small-spatial path: bn whole images per grid step.
        grid = (N // bn,)
        vmem_limit = _vmem_limit(bn * Cin * HW * in_bytes,
                                 bn * Cout * HW * out_bytes, weight_bytes)
        out3d = pl.pallas_call(
            _kernel_batched,
            out_shape=jax.ShapeDtypeStruct((N, Cout, HW), out_dtype),
            grid_spec=pl.GridSpec(
                grid=grid,
                in_specs=[
                    pl.BlockSpec((Cout, Cin), lambda i: (0, 0)),
                    pl.BlockSpec((Cout, 1), lambda i: (0, 0)),
                    pl.BlockSpec((bn, Cin, HW), lambda i: (i, 0, 0)),
                ],
                out_specs=pl.BlockSpec((bn, Cout, HW), lambda i: (i, 0, 0)),
            ),
            compiler_params=pltpu.CompilerParams(
                dimension_semantics=("parallel",),
                vmem_limit_bytes=vmem_limit),
            cost_estimate=cost,
        )(w_scaled, shift, x3d)
    else:
        # Per-image path with lane-dense HW tiling.
        grid = (N, pl.cdiv(HW, t_hw))
        vmem_limit = _vmem_limit(Cin * t_hw * in_bytes,
                                 Cout * t_hw * out_bytes, weight_bytes)
        out3d = pl.pallas_call(
            _kernel_per_image,
            out_shape=jax.ShapeDtypeStruct((N, Cout, HW), out_dtype),
            grid_spec=pl.GridSpec(
                grid=grid,
                in_specs=[
                    pl.BlockSpec((Cout, Cin), lambda n, j: (0, 0)),
                    pl.BlockSpec((Cout, 1), lambda n, j: (0, 0)),
                    pl.BlockSpec((None, Cin, t_hw), lambda n, j: (n, 0, j)),
                ],
                out_specs=pl.BlockSpec((None, Cout, t_hw),
                                       lambda n, j: (n, 0, j)),
            ),
            compiler_params=pltpu.CompilerParams(
                dimension_semantics=("parallel", "parallel"),
                vmem_limit_bytes=vmem_limit),
            cost_estimate=cost,
        )(w_scaled, shift, x3d)

    return out3d.reshape(N, Cout, H, W)


# ----------------------------- reference -------------------------------------

def reference(x_nchw, w, b, gamma, beta, running_mean, running_var, eps=1e-5):
    y = jnp.einsum("nchw,oc->nohw", x_nchw, w) + b[None, :, None, None]
    y = (y - running_mean[None, :, None, None]) / jnp.sqrt(
        running_var[None, :, None, None] + eps)
    y = y * gamma[None, :, None, None] + beta[None, :, None, None]
    return jnp.maximum(y, 0.0)


def _make_params(key, input_dim, embed_dim):
    kw, kb, kg, kbe, km, kv = jax.random.split(key, 6)
    w = jax.random.normal(kw, (embed_dim, input_dim), dtype=jnp.float32) * 0.05
    b = jax.random.normal(kb, (embed_dim,), dtype=jnp.float32) * 0.1
    gamma = 1.0 + 0.1 * jax.random.normal(kg, (embed_dim,), dtype=jnp.float32)
    beta = 0.1 * jax.random.normal(kbe, (embed_dim,), dtype=jnp.float32)
    rmean = 0.1 * jax.random.normal(km, (embed_dim,), dtype=jnp.float32)
    rvar = jnp.abs(1.0 + 0.1 * jax.random.normal(kv, (embed_dim,),
                                                 dtype=jnp.float32))
    return w, b, gamma, beta, rmean, rvar


if __name__ == "__main__":
    key = jax.random.PRNGKey(0)
    kx1, kx2, kp = jax.random.split(key, 3)

    input_dim, embed_dim = 32, 64
    w, b, gamma, beta, rmean, rvar = _make_params(kp, input_dim, embed_dim)

    # Case 1: small spatial (16x16), batch 4 -> exercises the batched path.
    x1 = jax.random.normal(kx1, (4, input_dim, 16, 16), dtype=jnp.float32)
    out1 = jax.block_until_ready(
        conv_de_head(x1, w, b, gamma, beta, rmean, rvar))
    ref1 = reference(x1, w, b, gamma, beta, rmean, rvar)
    assert out1.shape == (4, embed_dim, 16, 16)
    assert jnp.allclose(out1, ref1, atol=1e-4, rtol=1e-4)

    # Case 2: larger spatial (64x64), batch 2 -> exercises the per-image path.
    x2 = jax.random.normal(kx2, (2, input_dim, 64, 64), dtype=jnp.float32)
    out2 = jax.block_until_ready(
        conv_de_head(x2, w, b, gamma, beta, rmean, rvar))
    ref2 = reference(x2, w, b, gamma, beta, rmean, rvar)
    assert out2.shape == (2, embed_dim, 64, 64)
    assert jnp.allclose(out2, ref2, atol=1e-4, rtol=1e-4)

    # Case 3: bf16 output (f32 accumulation) -> memory-bound fast path.
    out3 = jax.block_until_ready(
        conv_de_head(x1, w, b, gamma, beta, rmean, rvar,
                     out_dtype=jnp.bfloat16))
    assert out3.dtype == jnp.bfloat16
    assert jnp.allclose(out3.astype(jnp.float32), ref1, atol=5e-2, rtol=5e-2)

    print("KERNEL_OK")
</pallas_src>

<mosaic_0001>
module attributes {stable_mosaic.version = 11 : i64} {
  func.func @_kernel_batched(%arg0: i32, %arg1: memref<64x32xf32, #tpu.memory_space<vmem>>, %arg2: memref<64x1xf32, #tpu.memory_space<vmem>>, %arg3: memref<2x32x256xf32, #tpu.memory_space<vmem>>, %arg4: memref<2x64x256xf32, #tpu.memory_space<vmem>>) attributes {dimension_semantics = [#tpu.dimension_semantics<parallel>], iteration_bounds = array<i64: 2>, scalar_prefetch = 0 : i64, scratch_operands = 0 : i64, tpu.core_type = #tpu.core_type<tc>, window_params = [{pipeline_mode = #tpu.pipeline_mode<synchronous>, transform_indices = @transform_0, window_bounds = array<i64: 64, 32>}, {pipeline_mode = #tpu.pipeline_mode<synchronous>, transform_indices = @transform_1, window_bounds = array<i64: 64, 1>}, {transform_indices = @transform_2, window_bounds = array<i64: 2, 32, 256>}, {transform_indices = @transform_3, window_bounds = array<i64: 2, 64, 256>}]} {
    %c0 = arith.constant 0 : index
    %c0_0 = arith.constant 0 : index
    %0 = vector.load %arg1[%c0, %c0_0] : memref<64x32xf32, #tpu.memory_space<vmem>>, vector<64x32xf32>
    %c0_1 = arith.constant 0 : index
    %c0_2 = arith.constant 0 : index
    %1 = vector.load %arg2[%c0_1, %c0_2] : memref<64x1xf32, #tpu.memory_space<vmem>>, vector<64x1xf32>
    %c0_3 = arith.constant 0 : index
    %c0_4 = arith.constant 0 : index
    %c0_5 = arith.constant 0 : index
    %2 = vector.load %arg3[%c0_3, %c0_4, %c0_5] : memref<2x32x256xf32, #tpu.memory_space<vmem>>, vector<1x32x256xf32>
    %3 = vector.shape_cast %2 : vector<1x32x256xf32> to vector<32x256xf32>
    %cst = arith.constant dense<0.000000e+00> : vector<64x256xf32>
    %4 = tpu.matmul %0, %3, %cst {dimension_numbers = #tpu.dot_dimension_numbers<[1], [0], [0], [1], [0, 0, 1, 1], [], []>} : vector<64x32xf32>, vector<32x256xf32>, vector<64x256xf32> -> vector<64x256xf32>
    %5 = vector.broadcast %1 : vector<64x1xf32> to vector<64x256xf32>
    %6 = arith.addf %4, %5 : vector<64x256xf32>
    %cst_6 = arith.constant 0.000000e+00 : f32
    %7 = vector.broadcast %cst_6 : f32 to vector<64x256xf32>
    %8 = arith.maximumf %6, %7 : vector<64x256xf32>
    %c0_7 = arith.constant 0 : index
    %c0_8 = arith.constant 0 : index
    %c0_9 = arith.constant 0 : index
    %9 = vector.load %arg4[%c0_7, %c0_8, %c0_9] : memref<2x64x256xf32, #tpu.memory_space<vmem>>, vector<1x64x256xf32>
    %10 = vector.shape_cast %9 : vector<1x64x256xf32> to vector<64x256xf32>
    %11 = vector.shape_cast %8 : vector<64x256xf32> to vector<1x64x256xf32>
    tpu.vector_store %arg4[%c0_7, %c0_8, %c0_9], %11 {strides = array<i32>} : memref<2x64x256xf32, #tpu.memory_space<vmem>>, vector<1x64x256xf32>,
    %c1 = arith.constant 1 : index
    %c0_10 = arith.constant 0 : index
    %c0_11 = arith.constant 0 : index
    %12 = vector.load %arg3[%c1, %c0_10, %c0_11] : memref<2x32x256xf32, #tpu.memory_space<vmem>>, vector<1x32x256xf32>
    %13 = vector.shape_cast %12 : vector<1x32x256xf32> to vector<32x256xf32>
    %cst_12 = arith.constant dense<0.000000e+00> : vector<64x256xf32>
    %14 = tpu.matmul %0, %13, %cst_12 {dimension_numbers = #tpu.dot_dimension_numbers<[1], [0], [0], [1], [0, 0, 1, 1], [], []>} : vector<64x32xf32>, vector<32x256xf32>, vector<64x256xf32> -> vector<64x256xf32>
    %15 = vector.broadcast %1 : vector<64x1xf32> to vector<64x256xf32>
    %16 = arith.addf %14, %15 : vector<64x256xf32>
    %cst_13 = arith.constant 0.000000e+00 : f32
    %17 = vector.broadcast %cst_13 : f32 to vector<64x256xf32>
    %18 = arith.maximumf %16, %17 : vector<64x256xf32>
    %c1_14 = arith.constant 1 : index
    %c0_15 = arith.constant 0 : index
    %c0_16 = arith.constant 0 : index
    %19 = vector.load %arg4[%c1_14, %c0_15, %c0_16] : memref<2x64x256xf32, #tpu.memory_space<vmem>>, vector<1x64x256xf32>
    %20 = vector.shape_cast %19 : vector<1x64x256xf32> to vector<64x256xf32>
    %21 = vector.shape_cast %18 : vector<64x256xf32> to vector<1x64x256xf32>
    tpu.vector_store %arg4[%c1_14, %c0_15, %c0_16], %21 {strides = array<i32>} : memref<2x64x256xf32, #tpu.memory_space<vmem>>, vector<1x64x256xf32>,
    return
  }
  func.func @transform_0(%arg0: i32) -> (i32, i32) {
    %c0_i32 = arith.constant 0 : i32
    %c0_i32_0 = arith.constant 0 : i32
    %c0_i32_1 = arith.constant 0 : i32
    return %c0_i32, %c0_i32_0 : i32, i32
  }
  func.func @transform_1(%arg0: i32) -> (i32, i32) {
    %c0_i32 = arith.constant 0 : i32
    %c0_i32_0 = arith.constant 0 : i32
    %c0_i32_1 = arith.constant 0 : i32
    return %c0_i32, %c0_i32_0 : i32, i32
  }
  func.func @transform_2(%arg0: i32) -> (i32, i32, i32) {
    %c0_i32 = arith.constant 0 : i32
    %c0_i32_0 = arith.constant 0 : i32
    %c0_i32_1 = arith.constant 0 : i32
    return %arg0, %c0_i32, %c0_i32_0 : i32, i32, i32
  }
  func.func @transform_3(%arg0: i32) -> (i32, i32, i32) {
    %c0_i32 = arith.constant 0 : i32
    %c0_i32_0 = arith.constant 0 : i32
    %c0_i32_1 = arith.constant 0 : i32
    return %arg0, %c0_i32, %c0_i32_0 : i32, i32, i32
  }
}

</mosaic_0001>

<llo_original>
// kernel: tpu_custom_call.1
$region0: #{tpu_custom_call.1}
  #allocation0 [shape = 'u32[]', space=smem, size = 0x4, offset = 0x4, fixed_abs, tag = 'smem constant byte address 0x4 - core index']
  #allocation1 [shape = 'u32[72,128]{1,0:T(1,128)}', space=vmem, size = 0x9000, scoped, tag = 'internal scratch']
  %s0 = inlined_call_operand.vmem [shape: f32[64,32], index: 0, kind: input, shape index: {}]
  %s1 = inlined_call_operand.vmem [shape: f32[64,1], index: 1, kind: input, shape index: {}]
  %s2 = inlined_call_operand.hbm [shape: f32[4,32,256], index: 2, kind: input, shape index: {}]
  %s3 = inlined_call_operand.hbm [shape: f32[4,64,256], index: 3, kind: output, shape index: {}]
  %s4 = sld [smem:[#allocation0]]
  $region49: #{tpu_custom_call.1} parent=0
    _
  %s6 = ssub.s32 1, %s4
  %s7 = scalar_select 0, %s6, %s4
  $region1: #{tpu_custom_call.1} parent=0
    #allocation2 [shape = 'u8[131072]{0}', space=vmem, size = 0x20000, scoped, tag = 'input window, operand 2']
    #allocation3 [shape = 's32[2]{0}', space=sflag, size = 0x8, scoped, tag = 'scoped memory for tpu_custom_call.1']
    #allocation4 [shape = 's32[2]{0}', space=sflag, size = 0x8, scoped, tag = 'scoped memory for tpu_custom_call.1']
    #allocation5 [shape = 'u8[262144]{0}', space=vmem, size = 0x40000, scoped, tag = 'output window, operand 0']
    %8 = vsyncpa [#allocation3], 0
    %s9 = scalar_lea.sflag [#allocation3], 1
    %10 = vsyncpa %s9, 0
    %11 = vsyncpa [#allocation4], 0
    %s12 = scalar_lea.sflag [#allocation4], 1
    %13 = vsyncpa %s12, 0
    loop: start=0, step=1, limit=4
    $region2: #{tpu_custom_call.1} parent=1 // loop_pre_header
      _
    $region3: #{tpu_custom_call.1} parent=1 // loop_header
      %s15 = sphi 0, %s19
      %p16 = scmp.ge.s32.totalorder %s15, 4
      %s23 = sphi 0, %s23
      %s25 = sphi 0, %s23
      %s26 = sphi 0, %s25
      %s40 = sphi 0, %s26
      %s44 = sphi 0, %s44
      %s46 = sphi 0, %s44
      %s47 = sphi 0, %s46
      %s61 = sphi 0, %s47
      %s67 = sphi 0, %s69
      %s70 = sphi 0, %s67
      %s71 = sphi 0, %s70
      %s87 = sphi 0, %s71
      %s93 = sphi 0, %s95
      %s96 = sphi 0, %s93
      %s97 = sphi 0, %s96
      %s113 = sphi 0, %s97
    $region4: #{tpu_custom_call.1} parent=1 // loop_header_branch
      %18 = sbr.rel (%p16) target = $region8
    $region5: #{tpu_custom_call.1} parent=1 // loop_body
      %s20 = ssub.s32 %s15, 1
      %s21 = ssub.s32 %s15, 2
      %s22 = sadd.s32 %s15, 1
      %s24 = sadd.s32 %s23, 1
      %p27 = scmp.eq.s32.totalorder %s15, 1
      %p28 = scmp.ne.s32.totalorder %s23, %s25
      %p29 = scmp.eq.s32.totalorder %s15, 0
      %p30 = por %p28, %p29
      %p31 = scmp.ne.s32.totalorder %s23, %s25
      %p32 = scmp.eq.s32.totalorder %s20, 1
      %p33 = por %p31, %p32
      %p34 = scmp.ne.s32.totalorder %s25, %s26
      %p35 = scmp.eq.s32.totalorder %s20, 0
      %p36 = por %p34, %p35
      %p37 = scmp.ne.s32.totalorder %s25, %s26
      %p38 = scmp.eq.s32.totalorder %s21, 1
      %p39 = por %p37, %p38
      %p41 = scmp.ne.s32.totalorder %s26, %s40
      %p42 = scmp.eq.s32.totalorder %s21, 0
      %p43 = por %p41, %p42
      %s45 = sadd.s32 %s44, 1
      %p48 = scmp.eq.s32.totalorder %s15, 1
      %p49 = scmp.ne.s32.totalorder %s44, %s46
      %p50 = scmp.eq.s32.totalorder %s15, 0
      %p51 = por %p49, %p50
      %p52 = scmp.ne.s32.totalorder %s44, %s46
      %p53 = scmp.eq.s32.totalorder %s20, 1
      %p54 = por %p52, %p53
      %p55 = scmp.ne.s32.totalorder %s46, %s47
      %p56 = scmp.eq.s32.totalorder %s20, 0
      %p57 = por %p55, %p56
      %p58 = scmp.ne.s32.totalorder %s46, %s47
      %p59 = scmp.eq.s32.totalorder %s21, 1
      %p60 = por %p58, %p59
      %p62 = scmp.ne.s32.totalorder %s47, %s61
      %p63 = scmp.eq.s32.totalorder %s21, 0
      %p64 = por %p62, %p63
      %s65 = ssub.s32 %s15, %s22
      %p66 = scmp.eq.s32.totalorder %s65, 0
      %s68 = sadd.s32 %s67, 1
      %s69 = scalar_select %p66, %s67, %s68
      %p72 = pneg %p66
      %p73 = scmp.eq.s32.totalorder %s15, 1
      %p74 = por %p72, %p73
      %p75 = scmp.ne.s32.totalorder %s67, %s70
      %p76 = scmp.eq.s32.totalorder %s15, 0
      %p77 = por %p75, %p76
      %p78 = scmp.ne.s32.totalorder %s67, %s70
      %p79 = scmp.eq.s32.totalorder %s20, 1
      %p80 = por %p78, %p79
      %p81 = scmp.ne.s32.totalorder %s70, %s71
      %p82 = scmp.eq.s32.totalorder %s20, 0
      %p83 = por %p81, %p82
      %p84 = scmp.ne.s32.totalorder %s70, %s71
      %p85 = scmp.eq.s32.totalorder %s21, 1
      %p86 = por %p84, %p85
      %p88 = scmp.ne.s32.totalorder %s71, %s87
      %p89 = scmp.eq.s32.totalorder %s21, 0
      %p90 = por %p88, %p89
      %s91 = ssub.s32 %s15, %s22
      %p92 = scmp.eq.s32.totalorder %s91, 0
      %s94 = sadd.s32 %s93, 1
      %s95 = scalar_select %p92, %s93, %s94
      %p98 = pneg %p92
      %p99 = scmp.eq.s32.totalorder %s15, 1
      %p100 = por %p98, %p99
      %p101 = scmp.ne.s32.totalorder %s93, %s96
      %p102 = scmp.eq.s32.totalorder %s15, 0
      %p103 = por %p101, %p102
      %p104 = scmp.ne.s32.totalorder %s93, %s96
      %p105 = scmp.eq.s32.totalorder %s20, 1
      %p106 = por %p104, %p105
      %p107 = scmp.ne.s32.totalorder %s96, %s97
      %p108 = scmp.eq.s32.totalorder %s20, 0
      %p109 = por %p107, %p108
      %p110 = scmp.ne.s32.totalorder %s96, %s97
      %p111 = scmp.eq.s32.totalorder %s21, 1
      %p112 = por %p110, %p111
      %p114 = scmp.ne.s32.totalorder %s97, %s113
      %p115 = scmp.eq.s32.totalorder %s21, 0
      %p116 = por %p114, %p115
      %p117 = scmp.le.s32.totalorder 1, %s15
      %p118 = scmp.lt.s32.totalorder %s15, 3
      %p119 = pnand %p117, %p118
      %p120 = pneg %p119
      // Predicated region
      $region9: #{tpu_custom_call.1} parent=5 // pred_check
        _
      $region10: #{tpu_custom_call.1} parent=5 // pred_check_branch
        %122 = sbr.rel (%p119) target = $region12
      $region11: #{tpu_custom_call.1} parent=5 // pred_region
        %s123 = ssub.s32 %s15, 1
        // Predicated region
        $region13: #{tpu_custom_call.1} parent=11 // pred_check
          %p124 = pneg %p36
        $region14: #{tpu_custom_call.1} parent=11 // pred_check_branch
          %126 = sbr.rel (%p124) target = $region16
        $region15: #{tpu_custom_call.1} parent=11 // pred_region
          _
        $region16: #{tpu_custom_call.1} parent=11 // pred_fallthru
          _
        // Predicated region
        $region17: #{tpu_custom_call.1} parent=11 // pred_check
          %p127 = pneg %p57
        $region18: #{tpu_custom_call.1} parent=11 // pred_check_branch
          %129 = sbr.rel (%p127) target = $region20
        $region19: #{tpu_custom_call.1} parent=11 // pred_region
          _
        $region20: #{tpu_custom_call.1} parent=11 // pred_fallthru
          _
      $region12: #{tpu_custom_call.1} parent=5 // pred_fallthru
        _
      %p130 = scmp.lt.s32.totalorder %s15, 2
      // Predicated region
      $region21: #{tpu_custom_call.1} parent=5 // pred_check
        %p131 = pneg %p130
      $region22: #{tpu_custom_call.1} parent=5 // pred_check_branch
        %133 = sbr.rel (%p131) target = $region24
      $region23: #{tpu_custom_call.1} parent=5 // pred_region
        // Predicated region
        $region25: #{tpu_custom_call.1} parent=23 // pred_check
          %p134 = pneg %p77
        $region26: #{tpu_custom_call.1} parent=23 // pred_check_branch
          %136 = sbr.rel (%p134) target = $region28
        $region27: #{tpu_custom_call.1} parent=23 // pred_region
          %s137 = sand.u32 %s67, 1
          %s138 = scalar_lea.sflag [#allocation3], %s137
          %s139 = sand.u32 %s67, 1
          %s140 = smul.addr %s139, 128
          %s141 = scalar_lea.vmem [#allocation2], %s140
          %s142 = smul.u32 2, %s15
          %144 = vsyncadd %s138, 0
          %s145 = smul.addr %s142, 8
          %s146 = smul.addr %s145, 8
          %s147 = scalar_lea.hbm %s2, %s146
          %s148 = sshll.u32 %s147, 4
          %s149 = int_to_ptr.hbm [resolvable:$true] %s148
          %s150 = sshll.u32 %s141, 4
          %s151 = int_to_ptr.vmem [resolvable:$true] %s150
          %156 = dma.hbm_to_vmem [thread:$0]  %s149, 2048, %s151, %s138, 256, 256, 16
        $region28: #{tpu_custom_call.1} parent=23 // pred_fallthru
          _
      $region24: #{tpu_custom_call.1} parent=5 // pred_fallthru
        _
      %p157 = scmp.le.s32.totalorder 1, %s15
      %p158 = scmp.lt.s32.totalorder %s15, 3
      %p159 = pnand %p157, %p158
      %p160 = pneg %p159
      // Predicated region
      $region29: #{tpu_custom_call.1} parent=5 // pred_check
        _
      $region30: #{tpu_custom_call.1} parent=5 // pred_check_branch
        %162 = sbr.rel (%p159) target = $region32
      $region31: #{tpu_custom_call.1} parent=5 // pred_region
        %s163 = ssub.s32 %s15, 1
        %s164 = sand.u32 %s70, 1
        %s165 = scalar_lea.sflag [#allocation3], %s164
        %s166 = sand.u32 %s70, 1
        %s167 = smul.addr %s166, 128
        %s168 = scalar_lea.vmem [#allocation2], %s167
        // Predicated region
        $region33: #{tpu_custom_call.1} parent=31 // pred_check
          %p169 = pneg %p83
        $region34: #{tpu_custom_call.1} parent=31 // pred_check_branch
          %171 = sbr.rel (%p169) target = $region36
        $region35: #{tpu_custom_call.1} parent=31 // pred_region
          %173 = dma.done %s165, 2048
        $region36: #{tpu_custom_call.1} parent=31 // pred_fallthru
          _
        %p174 = pneg %p36
        %p175 = pneg %p33
        %p176 = pneg %p57
        %p177 = pneg %p54
        %s178 = sand.u32 %s70, 1
        %s179 = scalar_lea.sflag [#allocation3], %s178
        %s180 = sand.u32 %s70, 1
        %s181 = smul.addr %s180, 128
        %s182 = scalar_lea.vmem [#allocation2], %s181
        %p183 = pneg %p83
        %p184 = pneg %p80
        %p185 = pneg %p109
        %p186 = pneg %p106
        %s187 = sand.u32 %s96, 1
        %s188 = scalar_lea.sflag [#allocation4], %s187
        %s189 = sand.u32 %s96, 1
        %s190 = smul.addr %s189, 256
        %s191 = scalar_lea.vmem [#allocation5], %s190
        %s192 = smul.u32 2, %s20
        %s193 = smul.u32 2, %s20
        %v194 = vld [vmem:[%s0] sm:$0xff]
        %v195 = vld [vmem:[%s0 + $0x8] sm:$0xff]
        %v196 = vld [vmem:[%s0 + $0x10] sm:$0xff]
        %v197 = vld [vmem:[%s0 + $0x18] sm:$0xff]
        %v198 = vld [vmem:[%s0 + $0x20] sm:$0xff]
        %v199 = vld [vmem:[%s0 + $0x28] sm:$0xff]
        %v200 = vld [vmem:[%s0 + $0x30] sm:$0xff]
        %v201 = vld [vmem:[%s0 + $0x38] sm:$0xff]
        %v202 = vld [vmem:[%s1] sm:$0xff]
        %v203 = vld [vmem:[%s1 + $0x8] sm:$0xff]
        %v204 = vld [vmem:[%s1 + $0x10] sm:$0xff]
        %v205 = vld [vmem:[%s1 + $0x18] sm:$0xff]
        %v206 = vld [vmem:[%s1 + $0x20] sm:$0xff]
        %v207 = vld [vmem:[%s1 + $0x28] sm:$0xff]
        %v208 = vld [vmem:[%s1 + $0x30] sm:$0xff]
        %v209 = vld [vmem:[%s1 + $0x38] sm:$0xff]
        %v210 = vld [vmem:[%s168] sm:$0xff]
        %v211 = vld [vmem:[%s168 + $0x8] sm:$0xff]
        %v212 = vld [vmem:[%s168 + $0x10] sm:$0xff]
        %v213 = vld [vmem:[%s168 + $0x18] sm:$0xff]
        %v214 = vld [vmem:[%s168 + $0x20] sm:$0xff]
        %v215 = vld [vmem:[%s168 + $0x28] sm:$0xff]
        %v216 = vld [vmem:[%s168 + $0x30] sm:$0xff]
        %v217 = vld [vmem:[%s168 + $0x38] sm:$0xff]
        %219 = vset.pattern.permute.xlu0 0
        %220 = vperm.xlu0 %219, %v202
        %v221 = vpop.permute.xlu0 %220
        %224 = vset.pattern.permute.xlu0 0
        %225 = vperm.xlu0 %224, %v203
        %v226 = vpop.permute.xlu0 %225
        %229 = vset.pattern.permute.xlu0 0
        %230 = vperm.xlu0 %229, %v204
        %v231 = vpop.permute.xlu0 %230
        %234 = vset.pattern.permute.xlu0 0
        %235 = vperm.xlu0 %234, %v205
        %v236 = vpop.permute.xlu0 %235
        %239 = vset.pattern.permute.xlu0 0
        %240 = vperm.xlu0 %239, %v206
        %v241 = vpop.permute.xlu0 %240
        %244 = vset.pattern.permute.xlu0 0
        %245 = vperm.xlu0 %244, %v207
        %v246 = vpop.permute.xlu0 %245
        %249 = vset.pattern.permute.xlu0 0
        %250 = vperm.xlu0 %249, %v208
        %v251 = vpop.permute.xlu0 %250
        %254 = vset.pattern.permute.xlu0 0
        %255 = vperm.xlu0 %254, %v209
        %v256 = vpop.permute.xlu0 %255
        %vm258 = vcmask 261120
        %v260 = vsel %vm258, %v194, 0
        %v263 = vsel %vm258, %v195, 0
        %v266 = vsel %vm258, %v196, 0
        %v269 = vsel %vm258, %v197, 0
        %v272 = vsel %vm258, %v198, 0
        %v275 = vsel %vm258, %v199, 0
        %v278 = vsel %vm258, %v200, 0
        %v281 = vsel %vm258, %v201, 0
        %283 = vmatpush.msra.mxu0 0.0
        %284 = vmatpush.msra.mxu0 0.0
        %285 = vmatpush.msra.mxu0 0.0
        %286 = vmatpush.msra.mxu0 0.0
        %287 = vmatpush.msra.mxu0 0.0
        %288 = vmatpush.msra.mxu0 0.0
        %289 = vmatpush.msra.mxu0 0.0
        %290 = vmatpush.msra.mxu0 0.0
        %291 = vmatpush.msra.mxu0 0.0
        %292 = vmatpush.msra.mxu0 0.0
        %293 = vmatpush.msra.mxu0 0.0
        %294 = vmatpush.msra.mxu0 0.0
        %295 = vmatpush.msra.mxu0 %v216
        %296 = vmatpush.msra.mxu0 %v214
        %297 = vmatpush.msra.mxu0 %v212
        %298 = vmatpush.msra.mxu0 %v210
        %299 = vmatmul.f32.gmra.mxu0 %v260
        %v300 = vpop.f32.mrf.mxu0
        %v301 = vadd.f32 %v221, %v300
        %302 = vmatmul.f32.gmra.mxu0 %v263
        %v303 = vpop.f32.mrf.mxu0
        %v304 = vadd.f32 %v226, %v303
        %305 = vmatmul.f32.gmra.mxu0 %v266
        %v306 = vpop.f32.mrf.mxu0
        %v307 = vadd.f32 %v231, %v306
        %308 = vmatmul.f32.gmra.mxu0 %v269
        %v309 = vpop.f32.mrf.mxu0
        %v310 = vadd.f32 %v236, %v309
        %311 = vmatmul.f32.gmra.mxu0 %v272
        %v312 = vpop.f32.mrf.mxu0
        %v313 = vadd.f32 %v241, %v312
        %314 = vmatmul.f32.gmra.mxu0 %v275
        %v315 = vpop.f32.mrf.mxu0
        %v316 = vadd.f32 %v246, %v315
        %317 = vmatmul.f32.gmra.mxu0 %v278
        %v318 = vpop.f32.mrf.mxu0
        %v319 = vadd.f32 %v251, %v318
        %320 = vmatmul.f32.gmra.mxu0 %v281
        %v321 = vpop.f32.mrf.mxu0
        %v322 = vadd.f32 %v256, %v321
        %323 = vdwg.mxu0
        %324 = vmatpush.msra.mxu0 0.0
        %325 = vmatpush.msra.mxu0 0.0
        %326 = vmatpush.msra.mxu0 0.0
        %327 = vmatpush.msra.mxu0 0.0
        %328 = vmatpush.msra.mxu0 0.0
        %329 = vmatpush.msra.mxu0 0.0
        %330 = vmatpush.msra.mxu0 0.0
        %331 = vmatpush.msra.mxu0 0.0
        %332 = vmatpush.msra.mxu0 0.0
        %333 = vmatpush.msra.mxu0 0.0
        %334 = vmatpush.msra.mxu0 0.0
        %335 = vmatpush.msra.mxu0 0.0
        %336 = vmatpush.msra.mxu0 %v217
        %337 = vmatpush.msra.mxu0 %v215
        %338 = vmatpush.msra.mxu0 %v213
        %339 = vmatpush.msra.mxu0 %v211
        %340 = vmatmul.f32.gmra.mxu0 %v260
        %v341 = vpop.f32.mrf.mxu0
        %v342 = vadd.f32 %v221, %v341
        %343 = vmatmul.f32.gmra.mxu0 %v263
        %v344 = vpop.f32.mrf.mxu0
        %v345 = vadd.f32 %v226, %v344
        %346 = vmatmul.f32.gmra.mxu0 %v266
        %v347 = vpop.f32.mrf.mxu0
        %v348 = vadd.f32 %v231, %v347
        %349 = vmatmul.f32.gmra.mxu0 %v269
        %v350 = vpop.f32.mrf.mxu0
        %v351 = vadd.f32 %v236, %v350
        %352 = vmatmul.f32.gmra.mxu0 %v272
        %v353 = vpop.f32.mrf.mxu0
        %v354 = vadd.f32 %v241, %v353
        %355 = vmatmul.f32.gmra.mxu0 %v275
        %v356 = vpop.f32.mrf.mxu0
        %v357 = vadd.f32 %v246, %v356
        %358 = vmatmul.f32.gmra.mxu0 %v278
        %v359 = vpop.f32.mrf.mxu0
        %v360 = vadd.f32 %v251, %v359
        %361 = vmatmul.f32.gmra.mxu0 %v281
        %v362 = vpop.f32.mrf.mxu0
        %v363 = vadd.f32 %v256, %v362
        %364 = vdwg.mxu0
        %v365 = vmax.f32 %v301, 0.0
        %v366 = vmax.f32 %v342, 0.0
        %v367 = vmax.f32 %v304, 0.0
        %v368 = vmax.f32 %v345, 0.0
        %v369 = vmax.f32 %v307, 0.0
        %v370 = vmax.f32 %v348, 0.0
        %v371 = vmax.f32 %v310, 0.0
        %v372 = vmax.f32 %v351, 0.0
        %v373 = vmax.f32 %v313, 0.0
        %v374 = vmax.f32 %v354, 0.0
        %v375 = vmax.f32 %v316, 0.0
        %v376 = vmax.f32 %v357, 0.0
        %v377 = vmax.f32 %v319, 0.0
        %v378 = vmax.f32 %v360, 0.0
        %v379 = vmax.f32 %v322, 0.0
        %v380 = vmax.f32 %v363, 0.0
        %381 = vst [vmem:[%s191] sm:$0xff] %v365
        %382 = vst [vmem:[%s191 + $0x8] sm:$0xff] %v366
        %383 = vst [vmem:[%s191 + $0x10] sm:$0xff] %v367
        %384 = vst [vmem:[%s191 + $0x18] sm:$0xff] %v368
        %385 = vst [vmem:[%s191 + $0x20] sm:$0xff] %v369
        %386 = vst [vmem:[%s191 + $0x28] sm:$0xff] %v370
        %387 = vst [vmem:[%s191 + $0x30] sm:$0xff] %v371
        %388 = vst [vmem:[%s191 + $0x38] sm:$0xff] %v372
        %389 = vst [vmem:[%s191 + $0x40] sm:$0xff] %v373
        %390 = vst [vmem:[%s191 + $0x48] sm:$0xff] %v374
        %391 = vst [vmem:[%s191 + $0x50] sm:$0xff] %v375
        %392 = vst [vmem:[%s191 + $0x58] sm:$0xff] %v376
        %393 = vst [vmem:[%s191 + $0x60] sm:$0xff] %v377
        %394 = vst [vmem:[%s191 + $0x68] sm:$0xff] %v378
        %395 = vst [vmem:[%s191 + $0x70] sm:$0xff] %v379
        %396 = vst [vmem:[%s191 + $0x78] sm:$0xff] %v380
        %s397 = scalar_lea.vmem %s168, 64 [#allocation2]
        %v398 = vld [vmem:[%s397] sm:$0xff]
        %v399 = vld [vmem:[%s397 + $0x8] sm:$0xff]
        %v400 = vld [vmem:[%s397 + $0x10] sm:$0xff]
        %v401 = vld [vmem:[%s397 + $0x18] sm:$0xff]
        %v402 = vld [vmem:[%s397 + $0x20] sm:$0xff]
        %v403 = vld [vmem:[%s397 + $0x28] sm:$0xff]
        %v404 = vld [vmem:[%s397 + $0x30] sm:$0xff]
        %v405 = vld [vmem:[%s397 + $0x38] sm:$0xff]
        %406 = vmatpush.msra.mxu0 0.0
        %407 = vmatpush.msra.mxu0 0.0
        %408 = vmatpush.msra.mxu0 0.0
        %409 = vmatpush.msra.mxu0 0.0
        %410 = vmatpush.msra.mxu0 0.0
        %411 = vmatpush.msra.mxu0 0.0
        %412 = vmatpush.msra.mxu0 0.0
        %413 = vmatpush.msra.mxu0 0.0
        %414 = vmatpush.msra.mxu0 0.0
        %415 = vmatpush.msra.mxu0 0.0
        %416 = vmatpush.msra.mxu0 0.0
        %417 = vmatpush.msra.mxu0 0.0
        %418 = vmatpush.msra.mxu0 %v404
        %419 = vmatpush.msra.mxu0 %v402
        %420 = vmatpush.msra.mxu0 %v400
        %421 = vmatpush.msra.mxu0 %v398
        %422 = vmatmul.f32.gmra.mxu0 %v260
        %v423 = vpop.f32.mrf.mxu0
        %v424 = vadd.f32 %v221, %v423
        %425 = vmatmul.f32.gmra.mxu0 %v263
        %v426 = vpop.f32.mrf.mxu0
        %v427 = vadd.f32 %v226, %v426
        %428 = vmatmul.f32.gmra.mxu0 %v266
        %v429 = vpop.f32.mrf.mxu0
        %v430 = vadd.f32 %v231, %v429
        %431 = vmatmul.f32.gmra.mxu0 %v269
        %v432 = vpop.f32.mrf.mxu0
        %v433 = vadd.f32 %v236, %v432
        %434 = vmatmul.f32.gmra.mxu0 %v272
        %v435 = vpop.f32.mrf.mxu0
        %v436 = vadd.f32 %v241, %v435
        %437 = vmatmul.f32.gmra.mxu0 %v275
        %v438 = vpop.f32.mrf.mxu0
        %v439 = vadd.f32 %v246, %v438
        %440 = vmatmul.f32.gmra.mxu0 %v278
        %v441 = vpop.f32.mrf.mxu0
        %v442 = vadd.f32 %v251, %v441
        %443 = vmatmul.f32.gmra.mxu0 %v281
        %v444 = vpop.f32.mrf.mxu0
        %v445 = vadd.f32 %v256, %v444
        %446 = vdwg.mxu0
        %447 = vmatpush.msra.mxu0 0.0
        %448 = vmatpush.msra.mxu0 0.0
        %449 = vmatpush.msra.mxu0 0.0
        %450 = vmatpush.msra.mxu0 0.0
        %451 = vmatpush.msra.mxu0 0.0
        %452 = vmatpush.msra.mxu0 0.0
        %453 = vmatpush.msra.mxu0 0.0
        %454 = vmatpush.msra.mxu0 0.0
        %455 = vmatpush.msra.mxu0 0.0
        %456 = vmatpush.msra.mxu0 0.0
        %457 = vmatpush.msra.mxu0 0.0
        %458 = vmatpush.msra.mxu0 0.0
        %459 = vmatpush.msra.mxu0 %v405
        %460 = vmatpush.msra.mxu0 %v403
        %461 = vmatpush.msra.mxu0 %v401
        %462 = vmatpush.msra.mxu0 %v399
        %463 = vmatmul.f32.gmra.mxu0 %v260
        %v464 = vpop.f32.mrf.mxu0
        %v465 = vadd.f32 %v221, %v464
        %466 = vmatmul.f32.gmra.mxu0 %v263
        %v467 = vpop.f32.mrf.mxu0
        %v468 = vadd.f32 %v226, %v467
        %469 = vmatmul.f32.gmra.mxu0 %v266
        %v470 = vpop.f32.mrf.mxu0
        %v471 = vadd.f32 %v231, %v470
        %472 = vmatmul.f32.gmra.mxu0 %v269
        %v473 = vpop.f32.mrf.mxu0
        %v474 = vadd.f32 %v236, %v473
        %475 = vmatmul.f32.gmra.mxu0 %v272
        %v476 = vpop.f32.mrf.mxu0
        %v477 = vadd.f32 %v241, %v476
        %478 = vmatmul.f32.gmra.mxu0 %v275
        %v479 = vpop.f32.mrf.mxu0
        %v480 = vadd.f32 %v246, %v479
        %481 = vmatmul.f32.gmra.mxu0 %v278
        %v482 = vpop.f32.mrf.mxu0
        %v483 = vadd.f32 %v251, %v482
        %484 = vmatmul.f32.gmra.mxu0 %v281
        %v485 = vpop.f32.mrf.mxu0
        %v486 = vadd.f32 %v256, %v485
        %487 = vdwg.mxu0
        %v488 = vmax.f32 %v424, 0.0
        %v489 = vmax.f32 %v465, 0.0
        %v490 = vmax.f32 %v427, 0.0
        %v491 = vmax.f32 %v468, 0.0
        %v492 = vmax.f32 %v430, 0.0
        %v493 = vmax.f32 %v471, 0.0
        %v494 = vmax.f32 %v433, 0.0
        %v495 = vmax.f32 %v474, 0.0
        %v496 = vmax.f32 %v436, 0.0
        %v497 = vmax.f32 %v477, 0.0
        %v498 = vmax.f32 %v439, 0.0
        %v499 = vmax.f32 %v480, 0.0
        %v500 = vmax.f32 %v442, 0.0
        %v501 = vmax.f32 %v483, 0.0
        %v502 = vmax.f32 %v445, 0.0
        %v503 = vmax.f32 %v486, 0.0
        %s504 = scalar_lea.vmem %s191, 128 [#allocation5]
        %505 = vst [vmem:[%s504] sm:$0xff] %v488
        %506 = vst [vmem:[%s504 + $0x8] sm:$0xff] %v489
        %507 = vst [vmem:[%s504 + $0x10] sm:$0xff] %v490
        %508 = vst [vmem:[%s504 + $0x18] sm:$0xff] %v491
        %509 = vst [vmem:[%s504 + $0x20] sm:$0xff] %v492
        %510 = vst [vmem:[%s504 + $0x28] sm:$0xff] %v493
        %511 = vst [vmem:[%s504 + $0x30] sm:$0xff] %v494
        %512 = vst [vmem:[%s504 + $0x38] sm:$0xff] %v495
        %513 = vst [vmem:[%s504 + $0x40] sm:$0xff] %v496
        %514 = vst [vmem:[%s504 + $0x48] sm:$0xff] %v497
        %515 = vst [vmem:[%s504 + $0x50] sm:$0xff] %v498
        %516 = vst [vmem:[%s504 + $0x58] sm:$0xff] %v499
        %517 = vst [vmem:[%s504 + $0x60] sm:$0xff] %v500
        %518 = vst [vmem:[%s504 + $0x68] sm:$0xff] %v501
        %519 = vst [vmem:[%s504 + $0x70] sm:$0xff] %v502
        %520 = vst [vmem:[%s504 + $0x78] sm:$0xff] %v503
        %s521 = sand.u32 %s96, 1
        %s522 = scalar_lea.sflag [#allocation4], %s521
        %s523 = sand.u32 %s96, 1
        %s524 = smul.addr %s523, 256
        %s525 = scalar_lea.vmem [#allocation5], %s524
        // Predicated region
        $region37: #{tpu_custom_call.1} parent=31 // pred_check
          %p526 = pneg %p106
        $region38: #{tpu_custom_call.1} parent=31 // pred_check_branch
          %528 = sbr.rel (%p526) target = $region40
        $region39: #{tpu_custom_call.1} parent=31 // pred_region
          %s529 = smul.u32 2, %s20
          %531 = vsyncadd %s522, 0
          %s532 = smul.addr %s529, 16
          %s533 = smul.addr %s532, 8
          %s534 = scalar_lea.hbm %s3, %s533
          %s535 = sshll.u32 %s525, 4
          %s536 = int_to_ptr.vmem [resolvable:$true] %s535
          %s537 = sshll.u32 %s534, 4
          %s538 = int_to_ptr.hbm [resolvable:$true] %s537
          %543 = dma.vmem_to_hbm [thread:$0]  %s536, 4096, %s538, %s522, 256, 256, 16
        $region40: #{tpu_custom_call.1} parent=31 // pred_fallthru
          _
      $region32: #{tpu_custom_call.1} parent=5 // pred_fallthru
        _
      %p544 = scmp.le.s32.totalorder 2, %s15
      // Predicated region
      $region41: #{tpu_custom_call.1} parent=5 // pred_check
        %p545 = pneg %p544
      $region42: #{tpu_custom_call.1} parent=5 // pred_check_branch
        %547 = sbr.rel (%p545) target = $region44
      $region43: #{tpu_custom_call.1} parent=5 // pred_region
        %s548 = ssub.s32 %s15, 2
        // Predicated region
        $region45: #{tpu_custom_call.1} parent=43 // pred_check
          %p549 = pneg %p112
        $region46: #{tpu_custom_call.1} parent=43 // pred_check_branch
          %551 = sbr.rel (%p549) target = $region48
        $region47: #{tpu_custom_call.1} parent=43 // pred_region
          %s552 = sand.u32 %s97, 1
          %s553 = scalar_lea.sflag [#allocation4], %s552
          %s554 = sand.u32 %s97, 1
          %s555 = smul.addr %s554, 256
          %s556 = scalar_lea.vmem [#allocation5], %s555
          %558 = dma.done %s553, 4096
        $region48: #{tpu_custom_call.1} parent=43 // pred_fallthru
          _
      $region44: #{tpu_custom_call.1} parent=5 // pred_fallthru
        _
    $region6: #{tpu_custom_call.1} parent=1 // loop_footer
      %s19 = sadd.s32 1, %s15
    $region7: #{tpu_custom_call.1} parent=1 // loop_footer_branch
      %14 = sbr.rel target = $region3
    $region8: #{tpu_custom_call.1} parent=1 // loop_exit
      _
    %559 = vsyncpa [#allocation3], 1
    %s560 = scalar_lea.sflag [#allocation3], 1
    %561 = vsyncpa %s560, 1
    %562 = vsyncpa [#allocation4], 1
    %s563 = scalar_lea.sflag [#allocation4], 1
    %564 = vsyncpa %s563, 1

</llo_original>
